<compile_context>
chip_gen: v7x
topology: tpu7x:2x2x1
jax: 0.10.0
libtpu: 0.0.40
codegen_flags: <defaults>
</compile_context>

<pallas_src>
import math
import functools

import jax
import jax.numpy as jnp
from jax.experimental import pallas as pl
from jax.experimental.pallas import tpu as pltpu


# ----------------------------------------------------------------------------
# Gabor kernel construction (matches gabor_fn in the PyTorch reference).
# ----------------------------------------------------------------------------
def gabor_fn(kernel_size, channel_in, channel_out, sigma, theta, Lambda, psi, gamma):
    sigma_x = sigma                       # (Cout,)
    sigma_y = sigma / gamma               # (Cout,) (gamma==0 -> inf, term vanishes, as in torch)
    xmax = kernel_size // 2
    ymax = kernel_size // 2
    ksize = 2 * xmax + 1

    coords = jnp.arange(-xmax, ymax + 1, dtype=jnp.float32)
    # y varies along the last axis, x along the second-to-last (same as the torch code)
    y = jnp.broadcast_to(coords.reshape(1, 1, 1, -1),
                         (channel_out, channel_in, ksize, ksize))
    x = jnp.broadcast_to(coords.reshape(1, 1, -1, 1),
                         (channel_out, channel_in, ksize, ksize))

    th = theta.reshape(-1, 1, 1, 1)
    x_theta = x * jnp.cos(th) + y * jnp.sin(th)
    y_theta = -x * jnp.sin(th) + y * jnp.cos(th)

    sx2 = sigma_x.reshape(-1, 1, 1, 1) ** 2
    sy2 = sigma_y.reshape(-1, 1, 1, 1) ** 2
    gb = jnp.exp(-0.5 * (x_theta ** 2 / sx2 + y_theta ** 2 / sy2)) * \
         jnp.cos(2.0 * math.pi / Lambda.reshape(-1, 1, 1, 1) * x_theta +
                 psi.reshape(-1, 1, 1, 1))
    return gb  # (Cout, Cin, K, K), float32


# ----------------------------------------------------------------------------
# Pallas conv2d kernel: grid = (batch, H-tile).  One im2col matmul per tile.
# ----------------------------------------------------------------------------
def _conv_kernel(x_ref, w_ref, o_ref, *, stride, th, k):
    # x_ref: (1, Hp, Wp, Cin)        whole padded image for this batch element
    # w_ref: (K*K*Cin, Cout_pad)     im2col-flattened Gabor filters (lane-dense)
    # o_ref: (1, TH, Wo, Cout_pad)   output H-tile (lane-dense last dim)
    j = pl.program_id(1)
    wo = o_ref.shape[2]
    cin = x_ref.shape[3]
    cout_pad = o_ref.shape[3]

    # Row window for this output tile (includes the K-1 halo).
    span = (th - 1) * stride + k
    row0 = pl.multiple_of(j * (th * stride), th * stride)
    xv = x_ref[0, pl.ds(row0, span), :, :]            # (span, Wp, Cin)

    # im2col: build the (TH*Wo, K*K*Cin) patch matrix once (K*K shifted views
    # concatenated along the channel axis), then a single MXU matmul with
    # f32 accumulation — no per-tap MXU drains or VPU accumulate passes.
    cols = []
    for kh in range(k):
        for kw in range(k):
            cols.append(
                xv[kh:kh + (th - 1) * stride + 1:stride,
                   kw:kw + (wo - 1) * stride + 1:stride, :])   # (TH, Wo, Cin)
    patches = jnp.concatenate(cols, axis=-1).reshape(th * wo, k * k * cin)

    out = jnp.dot(patches, w_ref[...], preferred_element_type=jnp.float32)
    o_ref[0] = out.reshape(th, wo, cout_pad).astype(o_ref.dtype)


def _pick_th(ho):
    # Prefer >=2 H-tiles (pipeline depth + megacore sharding on v7x) with a
    # sublane-friendly tile height; fall back to the whole image.
    for th in (64, 32, 16, 8):
        if ho % th == 0 and ho // th >= 2:
            return th
    return ho


def gabor_conv2d_pallas(x_nchw, weight_oihw, stride=1, padding=1,
                        compute_dtype=jnp.float32):
    """Conv2d(x, gabor_kernel) with PyTorch F.conv2d semantics (NCHW in/out).

    compute_dtype=jnp.bfloat16 halves DMA bytes and doubles MXU throughput on
    v6e/v7x (accumulation stays f32); default f32 matches torch numerics.
    """
    N, Cin, H, W = x_nchw.shape
    Cout, _, K, _ = weight_oihw.shape

    Ho = (H + 2 * padding - K) // stride + 1
    Wo = (W + 2 * padding - K) // stride + 1
    TH = _pick_th(Ho)
    n_ht = Ho // TH
    Cout_pad = ((Cout + 127) // 128) * 128   # lane-dense output stores

    # NCHW -> NHWC, pad spatial dims.
    # TODO(synk): fuse the pad / layout change into the kernel (or run the
    # surrounding model NHWC end-to-end) to drop these extra HBM passes.
    x_nhwc = jnp.transpose(x_nchw, (0, 2, 3, 1)).astype(compute_dtype)
    x_pad = jnp.pad(x_nhwc, ((0, 0), (padding, padding), (padding, padding), (0, 0)))
    Hp, Wp = H + 2 * padding, W + 2 * padding

    # OIHW -> HWIO, zero-pad Cout to a multiple of 128, flatten for im2col.
    w_hwio = jnp.transpose(weight_oihw, (2, 3, 1, 0)).astype(compute_dtype)
    w_flat = jnp.pad(w_hwio, ((0, 0), (0, 0), (0, 0), (0, Cout_pad - Cout)))
    w_flat = w_flat.reshape(K * K * Cin, Cout_pad)

    out_nhwc = pl.pallas_call(
        functools.partial(_conv_kernel, stride=stride, th=TH, k=K),
        out_shape=jax.ShapeDtypeStruct((N, Ho, Wo, Cout_pad), jnp.float32),
        grid_spec=pltpu.PrefetchScalarGridSpec(
            num_scalar_prefetch=0,
            grid=(N, n_ht),
            in_specs=[
                # Whole padded image per batch element; block index is
                # independent of the H-tile axis so it is DMA'd once per image.
                pl.BlockSpec((1, Hp, Wp, Cin), lambda n, j: (n, 0, 0, 0)),
                # Flattened weights, resident across the whole grid.
                pl.BlockSpec((K * K * Cin, Cout_pad), lambda n, j: (0, 0)),
            ],
            out_specs=pl.BlockSpec((1, TH, Wo, Cout_pad),
                                   lambda n, j: (n, j, 0, 0)),
        ),
        compiler_params=pltpu.CompilerParams(
            dimension_semantics=("parallel", "parallel")),
    )(x_pad, w_flat)

    # Drop the Cout padding, back to NCHW to match PyTorch.
    return jnp.transpose(out_nhwc[..., :Cout], (0, 3, 1, 2))


# ----------------------------------------------------------------------------
# Module-equivalent wrapper
# ----------------------------------------------------------------------------
class GaborConv2d:
    def __init__(self, channel_in, channel_out, kernel_size, stride=1, padding=1, key=None):
        self.kernel_size = kernel_size
        self.channel_in = channel_in
        self.channel_out = channel_out
        self.stride = stride
        self.padding = padding
        key = jax.random.PRNGKey(0) if key is None else key
        k1, k2, k3, k4 = jax.random.split(key, 4)
        # Deterministic init mirroring the PyTorch __init__:
        self.Lambda = jax.random.uniform(k1, (channel_out,), jnp.float32)        # torch.rand
        self.theta = jax.random.normal(k2, (channel_out,), jnp.float32) * 1.0    # randn * 1.0
        self.psi = jax.random.normal(k3, (channel_out,), jnp.float32) * 0.02     # randn * 0.02
        self.sigma = jax.random.normal(k4, (channel_out,), jnp.float32) * 1.0    # randn * 1.0
        self.gamma = jnp.zeros((channel_out,), jnp.float32)                      # randn * 0.0

    def __call__(self, x_nchw):
        kernel = gabor_fn(self.kernel_size, self.channel_in, self.channel_out,
                          self.sigma, self.theta, self.Lambda, self.psi, self.gamma)
        kernel = kernel.astype(jnp.float32)
        return gabor_conv2d_pallas(x_nchw, kernel, stride=self.stride, padding=self.padding)


if __name__ == "__main__":
    key = jax.random.PRNGKey(0)
    k_x, k_p = jax.random.split(key)

    # Small shapes consistent with the module: NCHW input.
    N, Cin, H, W = 2, 4, 16, 16
    Cout, K = 8, 3
    x = jax.random.normal(k_x, (N, Cin, H, W), jnp.float32)

    mod = GaborConv2d(channel_in=Cin, channel_out=Cout, kernel_size=K,
                      stride=1, padding=1, key=k_p)

    out = mod(x)
    out = jax.block_until_ready(out)

    # Cross-check against XLA's conv with identical Gabor weights.
    kernel = gabor_fn(K, Cin, Cout, mod.sigma, mod.theta, mod.Lambda, mod.psi, mod.gamma)
    ref = jax.lax.conv_general_dilated(
        x, kernel, window_strides=(1, 1), padding=((1, 1), (1, 1)),
        dimension_numbers=("NCHW", "OIHW", "NCHW"))
    assert out.shape == (N, Cout, H, W)
    assert jnp.allclose(out, ref, atol=1e-4, rtol=1e-4)

    print("KERNEL_OK")
</pallas_src>

<mosaic_0001>
module attributes {stable_mosaic.version = 11 : i64} {
  func.func @_conv_kernel(%arg0: i32, %arg1: i32, %arg2: memref<1x18x18x4xf32, #tpu.memory_space<vmem>>, %arg3: memref<36x128xf32, #tpu.memory_space<vmem>>, %arg4: memref<1x8x16x128xf32, #tpu.memory_space<vmem>>) attributes {dimension_semantics = [#tpu.dimension_semantics<parallel>, #tpu.dimension_semantics<parallel>], iteration_bounds = array<i64: 2, 2>, scalar_prefetch = 0 : i64, scratch_operands = 0 : i64, tpu.core_type = #tpu.core_type<tc>, window_params = [{transform_indices = @transform_0, window_bounds = array<i64: 1, 18, 18, 4>}, {pipeline_mode = #tpu.pipeline_mode<synchronous>, transform_indices = @transform_1, window_bounds = array<i64: 36, 128>}, {transform_indices = @transform_2, window_bounds = array<i64: 1, 8, 16, 128>}]} {
    %c8_i32 = arith.constant 8 : i32
    %0 = arith.muli %arg1, %c8_i32 : i32
    %1 = tpu.assume_multiple %0, 8 : i32
    %c0 = arith.constant 0 : index
    %2 = arith.index_cast %1 : i32 to index
    %c0_0 = arith.constant 0 : index
    %c0_1 = arith.constant 0 : index
    %3 = vector.load %arg2[%c0, %2, %c0_0, %c0_1] : memref<1x18x18x4xf32, #tpu.memory_space<vmem>>, vector<1x10x18x4xf32>
    %4 = vector.shape_cast %3 : vector<1x10x18x4xf32> to vector<10x18x4xf32>
    %5 = vector.extract_strided_slice %4 {offsets = [0, 0, 0], sizes = [8, 16, 4], strides = [1, 1, 1]} : vector<10x18x4xf32> to vector<8x16x4xf32>
    %6 = vector.extract_strided_slice %4 {offsets = [0, 1, 0], sizes = [8, 16, 4], strides = [1, 1, 1]} : vector<10x18x4xf32> to vector<8x16x4xf32>
    %7 = vector.extract_strided_slice %4 {offsets = [0, 2, 0], sizes = [8, 16, 4], strides = [1, 1, 1]} : vector<10x18x4xf32> to vector<8x16x4xf32>
    %8 = vector.extract_strided_slice %4 {offsets = [1, 0, 0], sizes = [8, 16, 4], strides = [1, 1, 1]} : vector<10x18x4xf32> to vector<8x16x4xf32>
    %9 = vector.extract_strided_slice %4 {offsets = [1, 1, 0], sizes = [8, 16, 4], strides = [1, 1, 1]} : vector<10x18x4xf32> to vector<8x16x4xf32>
    %10 = vector.extract_strided_slice %4 {offsets = [1, 2, 0], sizes = [8, 16, 4], strides = [1, 1, 1]} : vector<10x18x4xf32> to vector<8x16x4xf32>
    %11 = vector.extract_strided_slice %4 {offsets = [2, 0, 0], sizes = [8, 16, 4], strides = [1, 1, 1]} : vector<10x18x4xf32> to vector<8x16x4xf32>
    %12 = vector.extract_strided_slice %4 {offsets = [2, 1, 0], sizes = [8, 16, 4], strides = [1, 1, 1]} : vector<10x18x4xf32> to vector<8x16x4xf32>
    %13 = vector.extract_strided_slice %4 {offsets = [2, 2, 0], sizes = [8, 16, 4], strides = [1, 1, 1]} : vector<10x18x4xf32> to vector<8x16x4xf32>
    %14 = tpu.concatenate %5, %6, %7, %8, %9, %10, %11, %12, %13 in 2 : vector<8x16x4xf32>, vector<8x16x4xf32>, vector<8x16x4xf32>, vector<8x16x4xf32>, vector<8x16x4xf32>, vector<8x16x4xf32>, vector<8x16x4xf32>, vector<8x16x4xf32>, vector<8x16x4xf32> -> vector<8x16x36xf32>
    %15 = vector.shape_cast %14 : vector<8x16x36xf32> to vector<128x36xf32>
    %c0_2 = arith.constant 0 : index
    %c0_3 = arith.constant 0 : index
    %16 = vector.load %arg3[%c0_2, %c0_3] : memref<36x128xf32, #tpu.memory_space<vmem>>, vector<36x128xf32>
    %cst = arith.constant dense<0.000000e+00> : vector<128x128xf32>
    %17 = tpu.matmul %15, %16, %cst {dimension_numbers = #tpu.dot_dimension_numbers<[1], [0], [0], [1], [0, 0, 1, 1], [], []>} : vector<128x36xf32>, vector<36x128xf32>, vector<128x128xf32> -> vector<128x128xf32>
    %18 = vector.shape_cast %17 : vector<128x128xf32> to vector<8x16x128xf32>
    %c0_4 = arith.constant 0 : index
    %c0_5 = arith.constant 0 : index
    %c0_6 = arith.constant 0 : index
    %c0_7 = arith.constant 0 : index
    %19 = vector.load %arg4[%c0_4, %c0_5, %c0_6, %c0_7] : memref<1x8x16x128xf32, #tpu.memory_space<vmem>>, vector<1x8x16x128xf32>
    %20 = vector.shape_cast %19 : vector<1x8x16x128xf32> to vector<8x16x128xf32>
    %21 = vector.shape_cast %18 : vector<8x16x128xf32> to vector<1x8x16x128xf32>
    tpu.vector_store %arg4[%c0_4, %c0_5, %c0_6, %c0_7], %21 {strides = array<i32>} : memref<1x8x16x128xf32, #tpu.memory_space<vmem>>, vector<1x8x16x128xf32>,
    return
  }
  func.func @transform_0(%arg0: i32, %arg1: i32) -> (i32, i32, i32, i32) {
    %c0_i32 = arith.constant 0 : i32
    %c0_i32_0 = arith.constant 0 : i32
    %c0_i32_1 = arith.constant 0 : i32
    %c0_i32_2 = arith.constant 0 : i32
    return %arg0, %c0_i32, %c0_i32_0, %c0_i32_1 : i32, i32, i32, i32
  }
  func.func @transform_1(%arg0: i32, %arg1: i32) -> (i32, i32) {
    %c0_i32 = arith.constant 0 : i32
    %c0_i32_0 = arith.constant 0 : i32
    %c0_i32_1 = arith.constant 0 : i32
    return %c0_i32, %c0_i32_0 : i32, i32
  }
  func.func @transform_2(%arg0: i32, %arg1: i32) -> (i32, i32, i32, i32) {
    %c0_i32 = arith.constant 0 : i32
    %c0_i32_0 = arith.constant 0 : i32
    %c0_i32_1 = arith.constant 0 : i32
    return %arg0, %arg1, %c0_i32, %c0_i32_0 : i32, i32, i32, i32
  }
}

</mosaic_0001>

<llo_original>
// kernel: tpu_custom_call.1
$region0: #{tpu_custom_call.1}
  #allocation0 [shape = 'u32[]', space=smem, size = 0x4, offset = 0x4, fixed_abs, tag = 'smem constant byte address 0x4 - core index']
  #allocation1 [shape = 'u32[144,128]{1,0:T(1,128)}', space=vmem, size = 0x12000, scoped, tag = 'internal scratch']
  %s0 = inlined_call_operand.vmem [shape: f32[2,18,18,4], index: 0, kind: input, shape index: {}]
  %s1 = inlined_call_operand.vmem [shape: f32[36,128], index: 1, kind: input, shape index: {}]
  %s2 = inlined_call_operand.hbm [shape: f32[2,16,16,128], index: 2, kind: output, shape index: {}]
  %s3 = sld [smem:[#allocation0]]
  $region41: #{tpu_custom_call.1} parent=0
    _
  %s5 = ssub.s32 1, %s3
  %s6 = scalar_select 0, %s5, %s3
  $region1: #{tpu_custom_call.1} parent=0
    #allocation2 [shape = 'u8[131072]{0}', space=vmem, size = 0x20000, scoped, tag = 'output window, operand 0']
    #allocation3 [shape = 's32[2]{0}', space=sflag, size = 0x8, scoped, tag = 'scoped memory for tpu_custom_call.1']
    %7 = vsyncpa [#allocation3], 0
    %s8 = scalar_lea.sflag [#allocation3], 1
    %9 = vsyncpa %s8, 0
    loop: start=0, step=1, limit=6
    $region2: #{tpu_custom_call.1} parent=1 // loop_pre_header
      _
    $region3: #{tpu_custom_call.1} parent=1 // loop_header
      %s11 = sphi 0, %s15
      %p12 = scmp.ge.s32.totalorder %s11, 6
      %s18 = sphi 0, %s30
      %s19 = sphi 0, %s26
      %s20 = sphi 0, %s18
      %s21 = sphi 0, %s19
      %s22 = sphi 0, %s20
      %s23 = sphi 0, %s21
      %s33 = sphi 0, %s35
      %s36 = sphi 0, %s33
      %s37 = sphi 0, %s36
      %s53 = sphi 0, %s37
      %s57 = sphi 0, %s57
      %s59 = sphi 0, %s57
      %s60 = sphi 0, %s59
      %s74 = sphi 0, %s60
      %s82 = sphi 0, %s84
      %s85 = sphi 0, %s82
      %s86 = sphi 0, %s85
      %s102 = sphi 0, %s86
    $region4: #{tpu_custom_call.1} parent=1 // loop_header_branch
      %14 = sbr.rel (%p12) target = $region8
    $region5: #{tpu_custom_call.1} parent=1 // loop_body
      %s16 = ssub.s32 %s11, 1
      %s17 = ssub.s32 %s11, 2
      %s24 = sadd.s32 1, %s19
      %p25 = scmp.ge.s32.totalorder %s24, 2
      %s26 = scalar_select %p25, 0, %s24
      %s27 = sadd.s32 1, %s18
      %s28 = scalar_select %p25, %s27, %s18
      %p29 = scmp.ge.s32.totalorder %s28, 2
      %s30 = scalar_select %p29, 0, %s28
      %s31 = ssub.s32 %s18, %s30
      %p32 = scmp.eq.s32.totalorder %s31, 0
      %s34 = sadd.s32 %s33, 1
      %s35 = scalar_select %p32, %s33, %s34
      %p38 = pneg %p32
      %p39 = scmp.eq.s32.totalorder %s11, 3
      %p40 = por %p38, %p39
      %p41 = scmp.ne.s32.totalorder %s33, %s36
      %p42 = scmp.eq.s32.totalorder %s11, 0
      %p43 = por %p41, %p42
      %p44 = scmp.ne.s32.totalorder %s33, %s36
      %p45 = scmp.eq.s32.totalorder %s16, 3
      %p46 = por %p44, %p45
      %p47 = scmp.ne.s32.totalorder %s36, %s37
      %p48 = scmp.eq.s32.totalorder %s16, 0
      %p49 = por %p47, %p48
      %p50 = scmp.ne.s32.totalorder %s36, %s37
      %p51 = scmp.eq.s32.totalorder %s17, 3
      %p52 = por %p50, %p51
      %p54 = scmp.ne.s32.totalorder %s37, %s53
      %p55 = scmp.eq.s32.totalorder %s17, 0
      %p56 = por %p54, %p55
      %s58 = sadd.s32 %s57, 1
      %p61 = scmp.eq.s32.totalorder %s11, 3
      %p62 = scmp.ne.s32.totalorder %s57, %s59
      %p63 = scmp.eq.s32.totalorder %s11, 0
      %p64 = por %p62, %p63
      %p65 = scmp.ne.s32.totalorder %s57, %s59
      %p66 = scmp.eq.s32.totalorder %s16, 3
      %p67 = por %p65, %p66
      %p68 = scmp.ne.s32.totalorder %s59, %s60
      %p69 = scmp.eq.s32.totalorder %s16, 0
      %p70 = por %p68, %p69
      %p71 = scmp.ne.s32.totalorder %s59, %s60
      %p72 = scmp.eq.s32.totalorder %s17, 3
      %p73 = por %p71, %p72
      %p75 = scmp.ne.s32.totalorder %s60, %s74
      %p76 = scmp.eq.s32.totalorder %s17, 0
      %p77 = por %p75, %p76
      %s78 = ssub.s32 %s18, %s30
      %s79 = ssub.s32 %s19, %s26
      %s80 = sor.u32 %s78, %s79
      %p81 = scmp.eq.s32.totalorder %s80, 0
      %s83 = sadd.s32 %s82, 1
      %s84 = scalar_select %p81, %s82, %s83
      %p87 = pneg %p81
      %p88 = scmp.eq.s32.totalorder %s11, 3
      %p89 = por %p87, %p88
      %p90 = scmp.ne.s32.totalorder %s82, %s85
      %p91 = scmp.eq.s32.totalorder %s11, 0
      %p92 = por %p90, %p91
      %p93 = scmp.ne.s32.totalorder %s82, %s85
      %p94 = scmp.eq.s32.totalorder %s16, 3
      %p95 = por %p93, %p94
      %p96 = scmp.ne.s32.totalorder %s85, %s86
      %p97 = scmp.eq.s32.totalorder %s16, 0
      %p98 = por %p96, %p97
      %p99 = scmp.ne.s32.totalorder %s85, %s86
      %p100 = scmp.eq.s32.totalorder %s17, 3
      %p101 = por %p99, %p100
      %p103 = scmp.ne.s32.totalorder %s86, %s102
      %p104 = scmp.eq.s32.totalorder %s17, 0
      %p105 = por %p103, %p104
      %p106 = scmp.le.s32.totalorder 1, %s11
      %p107 = scmp.lt.s32.totalorder %s11, 5
      %p108 = pnand %p106, %p107
      %p109 = pneg %p108
      // Predicated region
      $region9: #{tpu_custom_call.1} parent=5 // pred_check
        _
      $region10: #{tpu_custom_call.1} parent=5 // pred_check_branch
        %111 = sbr.rel (%p108) target = $region12
      $region11: #{tpu_custom_call.1} parent=5 // pred_region
        %s112 = ssub.s32 %s11, 1
        // Predicated region
        $region13: #{tpu_custom_call.1} parent=11 // pred_check
          %p113 = pneg %p70
        $region14: #{tpu_custom_call.1} parent=11 // pred_check_branch
          %115 = sbr.rel (%p113) target = $region16
        $region15: #{tpu_custom_call.1} parent=11 // pred_region
          _
        $region16: #{tpu_custom_call.1} parent=11 // pred_fallthru
          _
      $region12: #{tpu_custom_call.1} parent=5 // pred_fallthru
        _
      %p116 = scmp.lt.s32.totalorder %s11, 4
      // Predicated region
      $region17: #{tpu_custom_call.1} parent=5 // pred_check
        %p117 = pneg %p116
      $region18: #{tpu_custom_call.1} parent=5 // pred_check_branch
        %119 = sbr.rel (%p117) target = $region20
      $region19: #{tpu_custom_call.1} parent=5 // pred_region
        // Predicated region
        $region21: #{tpu_custom_call.1} parent=19 // pred_check
          %p120 = pneg %p43
        $region22: #{tpu_custom_call.1} parent=19 // pred_check_branch
          %122 = sbr.rel (%p120) target = $region24
        $region23: #{tpu_custom_call.1} parent=19 // pred_region
          %p123 = scmp.lt.s32.totalorder %s18, 1
          %s124 = scalar_select %p123, %s18, 1
          %s125 = smul.addr %s124, 54
          %s126 = smul.addr %s125, 8
          %s127 = scalar_lea.vmem %s0, %s126
        $region24: #{tpu_custom_call.1} parent=19 // pred_fallthru
          _
      $region20: #{tpu_custom_call.1} parent=5 // pred_fallthru
        _
      %p128 = scmp.le.s32.totalorder 1, %s11
      %p129 = scmp.lt.s32.totalorder %s11, 5
      %p130 = pnand %p128, %p129
      %p131 = pneg %p130
      // Predicated region
      $region25: #{tpu_custom_call.1} parent=5 // pred_check
        _
      $region26: #{tpu_custom_call.1} parent=5 // pred_check_branch
        %133 = sbr.rel (%p130) target = $region28
      $region27: #{tpu_custom_call.1} parent=5 // pred_region
        %s134 = ssub.s32 %s11, 1
        %p135 = scmp.lt.s32.totalorder %s20, 1
        %s136 = scalar_select %p135, %s20, 1
        %s137 = smul.addr %s136, 54
        %s138 = smul.addr %s137, 8
        %s139 = scalar_lea.vmem %s0, %s138
        %p140 = pneg %p49
        %p141 = pneg %p46
        %p142 = pneg %p70
        %p143 = pneg %p67
        %p144 = pneg %p98
        %p145 = pneg %p95
        %s146 = sand.u32 %s85, 1
        %s147 = scalar_lea.sflag [#allocation3], %s146
        %s148 = sand.u32 %s85, 1
        %s149 = smul.addr %s148, 128
        %s150 = scalar_lea.vmem [#allocation2], %s149
        %p151 = scmp.lt.s32.totalorder %s20, 1
        %s152 = scalar_select %p151, %s20, 1
        %s153 = smul.addr %s152, 54
        %s154 = smul.addr %s153, 8
        %s155 = scalar_lea.vmem %s0, %s154
        %s156 = smul.u32 8, %s21
        %s157 = smul.u32 %s21, 8
        %s158 = smul.u32 %s157, 24
        %s159 = scalar_lea.vmem %s155, %s158
        %v160 = vld [vmem:[%s159] sm:$0xff]
        %v161 = vld [vmem:[%s159 + $0x8] sm:$0xff]
        %v162 = vld [vmem:[%s159 + $0x10] sm:$0x3]
        %v163 = vld [vmem:[%s159 + $0x18] sm:$0xff]
        %v164 = vld [vmem:[%s159 + $0x20] sm:$0xff]
        %v165 = vld [vmem:[%s159 + $0x28] sm:$0x3]
        %v166 = vld [vmem:[%s159 + $0x30] sm:$0xff]
        %v167 = vld [vmem:[%s159 + $0x38] sm:$0xff]
        %v168 = vld [vmem:[%s159 + $0x40] sm:$0x3]
        %v169 = vld [vmem:[%s159 + $0x48] sm:$0xff]
        %v170 = vld [vmem:[%s159 + $0x50] sm:$0xff]
        %v171 = vld [vmem:[%s159 + $0x58] sm:$0x3]
        %v172 = vld [vmem:[%s159 + $0x60] sm:$0xff]
        %v173 = vld [vmem:[%s159 + $0x68] sm:$0xff]
        %v174 = vld [vmem:[%s159 + $0x70] sm:$0x3]
        %v175 = vld [vmem:[%s159 + $0x78] sm:$0xff]
        %v176 = vld [vmem:[%s159 + $0x80] sm:$0xff]
        %v177 = vld [vmem:[%s159 + $0x88] sm:$0x3]
        %v178 = vld [vmem:[%s159 + $0x90] sm:$0xff]
        %v179 = vld [vmem:[%s159 + $0x98] sm:$0xff]
        %v180 = vld [vmem:[%s159 + $0xa0] sm:$0x3]
        %v181 = vld [vmem:[%s159 + $0xa8] sm:$0xff]
        %v182 = vld [vmem:[%s159 + $0xb0] sm:$0xff]
        %v183 = vld [vmem:[%s159 + $0xb8] sm:$0x3]
        %v184 = vld [vmem:[%s159 + $0xc0] sm:$0xff]
        %v185 = vld [vmem:[%s159 + $0xc8] sm:$0xff]
        %v186 = vld [vmem:[%s159 + $0xd0] sm:$0x3]
        %v187 = vld [vmem:[%s159 + $0xd8] sm:$0xff]
        %v188 = vld [vmem:[%s159 + $0xe0] sm:$0xff]
        %v189 = vld [vmem:[%s159 + $0xe8] sm:$0x3]
        %vm214 = vcmask 1046528
        %v215 = vrot.slane %v160, 1
        %v216 = vrot.slane %v161, 1
        %v217 = vsel %vm214, %v215, %v216
        %v218 = vrot.slane %v162, 1
        %v219 = vsel %vm214, %v216, %v218
        %v220 = vrot.slane %v163, 1
        %v221 = vrot.slane %v164, 1
        %v222 = vsel %vm214, %v220, %v221
        %v223 = vrot.slane %v165, 1
        %v224 = vsel %vm214, %v221, %v223
        %v225 = vrot.slane %v166, 1
        %v226 = vrot.slane %v167, 1
        %v227 = vsel %vm214, %v225, %v226
        %v228 = vrot.slane %v168, 1
        %v229 = vsel %vm214, %v226, %v228
        %v230 = vrot.slane %v169, 1
        %v231 = vrot.slane %v170, 1
        %v232 = vsel %vm214, %v230, %v231
        %v233 = vrot.slane %v171, 1
        %v234 = vsel %vm214, %v231, %v233
        %v235 = vrot.slane %v172, 1
        %v236 = vrot.slane %v173, 1
        %v237 = vsel %vm214, %v235, %v236
        %v238 = vrot.slane %v174, 1
        %v239 = vsel %vm214, %v236, %v238
        %v240 = vrot.slane %v175, 1
        %v241 = vrot.slane %v176, 1
        %v242 = vsel %vm214, %v240, %v241
        %v243 = vrot.slane %v177, 1
        %v244 = vsel %vm214, %v241, %v243
        %v245 = vrot.slane %v178, 1
        %v246 = vrot.slane %v179, 1
        %v247 = vsel %vm214, %v245, %v246
        %v248 = vrot.slane %v180, 1
        %v249 = vsel %vm214, %v246, %v248
        %v250 = vrot.slane %v181, 1
        %v251 = vrot.slane %v182, 1
        %v252 = vsel %vm214, %v250, %v251
        %v253 = vrot.slane %v183, 1
        %v254 = vsel %vm214, %v251, %v253
        %255 = vrot.lane.b32.xlu0 %v217, 4
        %v256 = vpop.permute.xlu0 %255
        %257 = vrot.lane.b32.xlu0 %v219, 4
        %v258 = vpop.permute.xlu0 %257
        %259 = vrot.lane.b32.xlu0 %v222, 4
        %v260 = vpop.permute.xlu0 %259
        %261 = vrot.lane.b32.xlu0 %v224, 4
        %v262 = vpop.permute.xlu0 %261
        %263 = vrot.lane.b32.xlu0 %v227, 4
        %v264 = vpop.permute.xlu0 %263
        %265 = vrot.lane.b32.xlu0 %v229, 4
        %v266 = vpop.permute.xlu0 %265
        %267 = vrot.lane.b32.xlu0 %v232, 4
        %v268 = vpop.permute.xlu0 %267
        %269 = vrot.lane.b32.xlu0 %v234, 4
        %v270 = vpop.permute.xlu0 %269
        %271 = vrot.lane.b32.xlu0 %v237, 4
        %v272 = vpop.permute.xlu0 %271
        %273 = vrot.lane.b32.xlu0 %v239, 4
        %v274 = vpop.permute.xlu0 %273
        %275 = vrot.lane.b32.xlu0 %v242, 4
        %v276 = vpop.permute.xlu0 %275
        %277 = vrot.lane.b32.xlu0 %v244, 4
        %v278 = vpop.permute.xlu0 %277
        %279 = vrot.lane.b32.xlu0 %v247, 4
        %v280 = vpop.permute.xlu0 %279
        %281 = vrot.lane.b32.xlu0 %v249, 4
        %v282 = vpop.permute.xlu0 %281
        %283 = vrot.lane.b32.xlu0 %v252, 4
        %v284 = vpop.permute.xlu0 %283
        %285 = vrot.lane.b32.xlu0 %v254, 4
        %v286 = vpop.permute.xlu0 %285
        %vm303 = vcmask 1045504
        %v304 = vrot.slane %v160, 2
        %v305 = vrot.slane %v161, 2
        %v306 = vsel %vm303, %v304, %v305
        %v307 = vrot.slane %v162, 2
        %v308 = vsel %vm303, %v305, %v307
        %v309 = vrot.slane %v163, 2
        %v310 = vrot.slane %v164, 2
        %v311 = vsel %vm303, %v309, %v310
        %v312 = vrot.slane %v165, 2
        %v313 = vsel %vm303, %v310, %v312
        %v314 = vrot.slane %v166, 2
        %v315 = vrot.slane %v167, 2
        %v316 = vsel %vm303, %v314, %v315
        %v317 = vrot.slane %v168, 2
        %v318 = vsel %vm303, %v315, %v317
        %v319 = vrot.slane %v169, 2
        %v320 = vrot.slane %v170, 2
        %v321 = vsel %vm303, %v319, %v320
        %v322 = vrot.slane %v171, 2
        %v323 = vsel %vm303, %v320, %v322
        %v324 = vrot.slane %v172, 2
        %v325 = vrot.slane %v173, 2
        %v326 = vsel %vm303, %v324, %v325
        %v327 = vrot.slane %v174, 2
        %v328 = vsel %vm303, %v325, %v327
        %v329 = vrot.slane %v175, 2
        %v330 = vrot.slane %v176, 2
        %v331 = vsel %vm303, %v329, %v330
        %v332 = vrot.slane %v177, 2
        %v333 = vsel %vm303, %v330, %v332
        %v334 = vrot.slane %v178, 2
        %v335 = vrot.slane %v179, 2
        %v336 = vsel %vm303, %v334, %v335
        %v337 = vrot.slane %v180, 2
        %v338 = vsel %vm303, %v335, %v337
        %v339 = vrot.slane %v181, 2
        %v340 = vrot.slane %v182, 2
        %v341 = vsel %vm303, %v339, %v340
        %v342 = vrot.slane %v183, 2
        %v343 = vsel %vm303, %v340, %v342
        %344 = vrot.lane.b32.xlu0 %v306, 8
        %v345 = vpop.permute.xlu0 %344
        %346 = vrot.lane.b32.xlu0 %v308, 8
        %v347 = vpop.permute.xlu0 %346
        %348 = vrot.lane.b32.xlu0 %v311, 8
        %v349 = vpop.permute.xlu0 %348
        %350 = vrot.lane.b32.xlu0 %v313, 8
        %v351 = vpop.permute.xlu0 %350
        %352 = vrot.lane.b32.xlu0 %v316, 8
        %v353 = vpop.permute.xlu0 %352
        %354 = vrot.lane.b32.xlu0 %v318, 8
        %v355 = vpop.permute.xlu0 %354
        %356 = vrot.lane.b32.xlu0 %v321, 8
        %v357 = vpop.permute.xlu0 %356
        %358 = vrot.lane.b32.xlu0 %v323, 8
        %v359 = vpop.permute.xlu0 %358
        %360 = vrot.lane.b32.xlu0 %v326, 8
        %v361 = vpop.permute.xlu0 %360
        %362 = vrot.lane.b32.xlu0 %v328, 8
        %v363 = vpop.permute.xlu0 %362
        %364 = vrot.lane.b32.xlu0 %v331, 8
        %v365 = vpop.permute.xlu0 %364
        %366 = vrot.lane.b32.xlu0 %v333, 8
        %v367 = vpop.permute.xlu0 %366
        %368 = vrot.lane.b32.xlu0 %v336, 8
        %v369 = vpop.permute.xlu0 %368
        %370 = vrot.lane.b32.xlu0 %v338, 8
        %v371 = vpop.permute.xlu0 %370
        %372 = vrot.lane.b32.xlu0 %v341, 8
        %v373 = vpop.permute.xlu0 %372
        %374 = vrot.lane.b32.xlu0 %v343, 8
        %v375 = vpop.permute.xlu0 %374
        %394 = vrot.lane.b32.xlu0 %v163, 12
        %v395 = vpop.permute.xlu0 %394
        %396 = vrot.lane.b32.xlu0 %v164, 12
        %v397 = vpop.permute.xlu0 %396
        %398 = vrot.lane.b32.xlu0 %v166, 12
        %v399 = vpop.permute.xlu0 %398
        %400 = vrot.lane.b32.xlu0 %v167, 12
        %v401 = vpop.permute.xlu0 %400
        %402 = vrot.lane.b32.xlu0 %v169, 12
        %v403 = vpop.permute.xlu0 %402
        %404 = vrot.lane.b32.xlu0 %v170, 12
        %v405 = vpop.permute.xlu0 %404
        %406 = vrot.lane.b32.xlu0 %v172, 12
        %v407 = vpop.permute.xlu0 %406
        %408 = vrot.lane.b32.xlu0 %v173, 12
        %v409 = vpop.permute.xlu0 %408
        %410 = vrot.lane.b32.xlu0 %v175, 12
        %v411 = vpop.permute.xlu0 %410
        %412 = vrot.lane.b32.xlu0 %v176, 12
        %v413 = vpop.permute.xlu0 %412
        %414 = vrot.lane.b32.xlu0 %v178, 12
        %v415 = vpop.permute.xlu0 %414
        %416 = vrot.lane.b32.xlu0 %v179, 12
        %v417 = vpop.permute.xlu0 %416
        %418 = vrot.lane.b32.xlu0 %v181, 12
        %v419 = vpop.permute.xlu0 %418
        %420 = vrot.lane.b32.xlu0 %v182, 12
        %v421 = vpop.permute.xlu0 %420
        %422 = vrot.lane.b32.xlu0 %v184, 12
        %v423 = vpop.permute.xlu0 %422
        %424 = vrot.lane.b32.xlu0 %v185, 12
        %v425 = vpop.permute.xlu0 %424
        %v443 = vrot.slane %v184, 1
        %v444 = vrot.slane %v185, 1
        %v445 = vsel %vm214, %v443, %v444
        %v446 = vrot.slane %v186, 1
        %v447 = vsel %vm214, %v444, %v446
        %448 = vrot.lane.b32.xlu0 %v222, 16
        %v449 = vpop.permute.xlu0 %448
        %450 = vrot.lane.b32.xlu0 %v224, 16
        %v451 = vpop.permute.xlu0 %450
        %452 = vrot.lane.b32.xlu0 %v227, 16
        %v453 = vpop.permute.xlu0 %452
        %454 = vrot.lane.b32.xlu0 %v229, 16
        %v455 = vpop.permute.xlu0 %454
        %456 = vrot.lane.b32.xlu0 %v232, 16
        %v457 = vpop.permute.xlu0 %456
        %458 = vrot.lane.b32.xlu0 %v234, 16
        %v459 = vpop.permute.xlu0 %458
        %460 = vrot.lane.b32.xlu0 %v237, 16
        %v461 = vpop.permute.xlu0 %460
        %462 = vrot.lane.b32.xlu0 %v239, 16
        %v463 = vpop.permute.xlu0 %462
        %464 = vrot.lane.b32.xlu0 %v242, 16
        %v465 = vpop.permute.xlu0 %464
        %466 = vrot.lane.b32.xlu0 %v244, 16
        %v467 = vpop.permute.xlu0 %466
        %468 = vrot.lane.b32.xlu0 %v247, 16
        %v469 = vpop.permute.xlu0 %468
        %470 = vrot.lane.b32.xlu0 %v249, 16
        %v471 = vpop.permute.xlu0 %470
        %472 = vrot.lane.b32.xlu0 %v252, 16
        %v473 = vpop.permute.xlu0 %472
        %474 = vrot.lane.b32.xlu0 %v254, 16
        %v475 = vpop.permute.xlu0 %474
        %476 = vrot.lane.b32.xlu0 %v445, 16
        %v477 = vpop.permute.xlu0 %476
        %478 = vrot.lane.b32.xlu0 %v447, 16
        %v479 = vpop.permute.xlu0 %478
        %v496 = vrot.slane %v184, 2
        %v497 = vrot.slane %v185, 2
        %v498 = vsel %vm303, %v496, %v497
        %v499 = vrot.slane %v186, 2
        %v500 = vsel %vm303, %v497, %v499
        %501 = vrot.lane.b32.xlu0 %v311, 20
        %v502 = vpop.permute.xlu0 %501
        %503 = vrot.lane.b32.xlu0 %v313, 20
        %v504 = vpop.permute.xlu0 %503
        %505 = vrot.lane.b32.xlu0 %v316, 20
        %v506 = vpop.permute.xlu0 %505
        %507 = vrot.lane.b32.xlu0 %v318, 20
        %v508 = vpop.permute.xlu0 %507
        %509 = vrot.lane.b32.xlu0 %v321, 20
        %v510 = vpop.permute.xlu0 %509
        %511 = vrot.lane.b32.xlu0 %v323, 20
        %v512 = vpop.permute.xlu0 %511
        %513 = vrot.lane.b32.xlu0 %v326, 20
        %v514 = vpop.permute.xlu0 %513
        %515 = vrot.lane.b32.xlu0 %v328, 20
        %v516 = vpop.permute.xlu0 %515
        %517 = vrot.lane.b32.xlu0 %v331, 20
        %v518 = vpop.permute.xlu0 %517
        %519 = vrot.lane.b32.xlu0 %v333, 20
        %v520 = vpop.permute.xlu0 %519
        %521 = vrot.lane.b32.xlu0 %v336, 20
        %v522 = vpop.permute.xlu0 %521
        %523 = vrot.lane.b32.xlu0 %v338, 20
        %v524 = vpop.permute.xlu0 %523
        %525 = vrot.lane.b32.xlu0 %v341, 20
        %v526 = vpop.permute.xlu0 %525
        %527 = vrot.lane.b32.xlu0 %v343, 20
        %v528 = vpop.permute.xlu0 %527
        %529 = vrot.lane.b32.xlu0 %v498, 20
        %v530 = vpop.permute.xlu0 %529
        %531 = vrot.lane.b32.xlu0 %v500, 20
        %v532 = vpop.permute.xlu0 %531
        %551 = vrot.lane.b32.xlu0 %v166, 24
        %v552 = vpop.permute.xlu0 %551
        %553 = vrot.lane.b32.xlu0 %v167, 24
        %v554 = vpop.permute.xlu0 %553
        %555 = vrot.lane.b32.xlu0 %v169, 24
        %v556 = vpop.permute.xlu0 %555
        %557 = vrot.lane.b32.xlu0 %v170, 24
        %v558 = vpop.permute.xlu0 %557
        %559 = vrot.lane.b32.xlu0 %v172, 24
        %v560 = vpop.permute.xlu0 %559
        %561 = vrot.lane.b32.xlu0 %v173, 24
        %v562 = vpop.permute.xlu0 %561
        %563 = vrot.lane.b32.xlu0 %v175, 24
        %v564 = vpop.permute.xlu0 %563
        %565 = vrot.lane.b32.xlu0 %v176, 24
        %v566 = vpop.permute.xlu0 %565
        %567 = vrot.lane.b32.xlu0 %v178, 24
        %v568 = vpop.permute.xlu0 %567
        %569 = vrot.lane.b32.xlu0 %v179, 24
        %v570 = vpop.permute.xlu0 %569
        %571 = vrot.lane.b32.xlu0 %v181, 24
        %v572 = vpop.permute.xlu0 %571
        %573 = vrot.lane.b32.xlu0 %v182, 24
        %v574 = vpop.permute.xlu0 %573
        %575 = vrot.lane.b32.xlu0 %v184, 24
        %v576 = vpop.permute.xlu0 %575
        %577 = vrot.lane.b32.xlu0 %v185, 24
        %v578 = vpop.permute.xlu0 %577
        %579 = vrot.lane.b32.xlu0 %v187, 24
        %v580 = vpop.permute.xlu0 %579
        %581 = vrot.lane.b32.xlu0 %v188, 24
        %v582 = vpop.permute.xlu0 %581
        %v600 = vrot.slane %v187, 1
        %v601 = vrot.slane %v188, 1
        %v602 = vsel %vm214, %v600, %v601
        %v603 = vrot.slane %v189, 1
        %v604 = vsel %vm214, %v601, %v603
        %605 = vrot.lane.b32.xlu0 %v227, 28
        %v606 = vpop.permute.xlu0 %605
        %607 = vrot.lane.b32.xlu0 %v229, 28
        %v608 = vpop.permute.xlu0 %607
        %609 = vrot.lane.b32.xlu0 %v232, 28
        %v610 = vpop.permute.xlu0 %609
        %611 = vrot.lane.b32.xlu0 %v234, 28
        %v612 = vpop.permute.xlu0 %611
        %613 = vrot.lane.b32.xlu0 %v237, 28
        %v614 = vpop.permute.xlu0 %613
        %615 = vrot.lane.b32.xlu0 %v239, 28
        %v616 = vpop.permute.xlu0 %615
        %617 = vrot.lane.b32.xlu0 %v242, 28
        %v618 = vpop.permute.xlu0 %617
        %619 = vrot.lane.b32.xlu0 %v244, 28
        %v620 = vpop.permute.xlu0 %619
        %621 = vrot.lane.b32.xlu0 %v247, 28
        %v622 = vpop.permute.xlu0 %621
        %623 = vrot.lane.b32.xlu0 %v249, 28
        %v624 = vpop.permute.xlu0 %623
        %625 = vrot.lane.b32.xlu0 %v252, 28
        %v626 = vpop.permute.xlu0 %625
        %627 = vrot.lane.b32.xlu0 %v254, 28
        %v628 = vpop.permute.xlu0 %627
        %629 = vrot.lane.b32.xlu0 %v445, 28
        %v630 = vpop.permute.xlu0 %629
        %631 = vrot.lane.b32.xlu0 %v447, 28
        %v632 = vpop.permute.xlu0 %631
        %633 = vrot.lane.b32.xlu0 %v602, 28
        %v634 = vpop.permute.xlu0 %633
        %635 = vrot.lane.b32.xlu0 %v604, 28
        %v636 = vpop.permute.xlu0 %635
        %v653 = vrot.slane %v187, 2
        %v654 = vrot.slane %v188, 2
        %v655 = vsel %vm303, %v653, %v654
        %v656 = vrot.slane %v189, 2
        %v657 = vsel %vm303, %v654, %v656
        %658 = vrot.lane.b32.xlu0 %v316, 32
        %v659 = vpop.permute.xlu0 %658
        %660 = vrot.lane.b32.xlu0 %v318, 32
        %v661 = vpop.permute.xlu0 %660
        %662 = vrot.lane.b32.xlu0 %v321, 32
        %v663 = vpop.permute.xlu0 %662
        %664 = vrot.lane.b32.xlu0 %v323, 32
        %v665 = vpop.permute.xlu0 %664
        %666 = vrot.lane.b32.xlu0 %v326, 32
        %v667 = vpop.permute.xlu0 %666
        %668 = vrot.lane.b32.xlu0 %v328, 32
        %v669 = vpop.permute.xlu0 %668
        %670 = vrot.lane.b32.xlu0 %v331, 32
        %v671 = vpop.permute.xlu0 %670
        %672 = vrot.lane.b32.xlu0 %v333, 32
        %v673 = vpop.permute.xlu0 %672
        %674 = vrot.lane.b32.xlu0 %v336, 32
        %v675 = vpop.permute.xlu0 %674
        %676 = vrot.lane.b32.xlu0 %v338, 32
        %v677 = vpop.permute.xlu0 %676
        %678 = vrot.lane.b32.xlu0 %v341, 32
        %v679 = vpop.permute.xlu0 %678
        %680 = vrot.lane.b32.xlu0 %v343, 32
        %v681 = vpop.permute.xlu0 %680
        %682 = vrot.lane.b32.xlu0 %v498, 32
        %v683 = vpop.permute.xlu0 %682
        %684 = vrot.lane.b32.xlu0 %v500, 32
        %v685 = vpop.permute.xlu0 %684
        %686 = vrot.lane.b32.xlu0 %v655, 32
        %v687 = vpop.permute.xlu0 %686
        %688 = vrot.lane.b32.xlu0 %v657, 32
        %v689 = vpop.permute.xlu0 %688
        %vm706 = vcmask 31744
        %v707 = vsel %vm706, %v160, %v256
        %v708 = vsel %vm706, %v161, %v258
        %v709 = vsel %vm706, %v163, %v260
        %v710 = vsel %vm706, %v164, %v262
        %v711 = vsel %vm706, %v166, %v264
        %v712 = vsel %vm706, %v167, %v266
        %v713 = vsel %vm706, %v169, %v268
        %v714 = vsel %vm706, %v170, %v270
        %v715 = vsel %vm706, %v172, %v272
        %v716 = vsel %vm706, %v173, %v274
        %v717 = vsel %vm706, %v175, %v276
        %v718 = vsel %vm706, %v176, %v278
        %v719 = vsel %vm706, %v178, %v280
        %v720 = vsel %vm706, %v179, %v282
        %v721 = vsel %vm706, %v181, %v284
        %v722 = vsel %vm706, %v182, %v286
        %vm723 = vcmask 64512
        %v724 = vsel %vm723, %v707, %v345
        %v725 = vsel %vm723, %v708, %v347
        %v726 = vsel %vm723, %v709, %v349
        %v727 = vsel %vm723, %v710, %v351
        %v728 = vsel %vm723, %v711, %v353
        %v729 = vsel %vm723, %v712, %v355
        %v730 = vsel %vm723, %v713, %v357
        %v731 = vsel %vm723, %v714, %v359
        %v732 = vsel %vm723, %v715, %v361
        %v733 = vsel %vm723, %v716, %v363
        %v734 = vsel %vm723, %v717, %v365
        %v735 = vsel %vm723, %v718, %v367
        %v736 = vsel %vm723, %v719, %v369
        %v737 = vsel %vm723, %v720, %v371
        %v738 = vsel %vm723, %v721, %v373
        %v739 = vsel %vm723, %v722, %v375
        %vm740 = vcmask 97280
        %v741 = vsel %vm740, %v724, %v395
        %v742 = vsel %vm740, %v725, %v397
        %v743 = vsel %vm740, %v726, %v399
        %v744 = vsel %vm740, %v727, %v401
        %v745 = vsel %vm740, %v728, %v403
        %v746 = vsel %vm740, %v729, %v405
        %v747 = vsel %vm740, %v730, %v407
        %v748 = vsel %vm740, %v731, %v409
        %v749 = vsel %vm740, %v732, %v411
        %v750 = vsel %vm740, %v733, %v413
        %v751 = vsel %vm740, %v734, %v415
        %v752 = vsel %vm740, %v735, %v417
        %v753 = vsel %vm740, %v736, %v419
        %v754 = vsel %vm740, %v737, %v421
        %v755 = vsel %vm740, %v738, %v423
        %v756 = vsel %vm740, %v739, %v425
        %vm757 = vcmask 130048
        %v758 = vsel %vm757, %v741, %v449
        %v759 = vsel %vm757, %v742, %v451
        %v760 = vsel %vm757, %v743, %v453
        %v761 = vsel %vm757, %v744, %v455
        %v762 = vsel %vm757, %v745, %v457
        %v763 = vsel %vm757, %v746, %v459
        %v764 = vsel %vm757, %v747, %v461
        %v765 = vsel %vm757, %v748, %v463
        %v766 = vsel %vm757, %v749, %v465
        %v767 = vsel %vm757, %v750, %v467
        %v768 = vsel %vm757, %v751, %v469
        %v769 = vsel %vm757, %v752, %v471
        %v770 = vsel %vm757, %v753, %v473
        %v771 = vsel %vm757, %v754, %v475
        %v772 = vsel %vm757, %v755, %v477
        %v773 = vsel %vm757, %v756, %v479
        %vm774 = vcmask 162816
        %v775 = vsel %vm774, %v758, %v502
        %v776 = vsel %vm774, %v759, %v504
        %v777 = vsel %vm774, %v760, %v506
        %v778 = vsel %vm774, %v761, %v508
        %v779 = vsel %vm774, %v762, %v510
        %v780 = vsel %vm774, %v763, %v512
        %v781 = vsel %vm774, %v764, %v514
        %v782 = vsel %vm774, %v765, %v516
        %v783 = vsel %vm774, %v766, %v518
        %v784 = vsel %vm774, %v767, %v520
        %v785 = vsel %vm774, %v768, %v522
        %v786 = vsel %vm774, %v769, %v524
        %v787 = vsel %vm774, %v770, %v526
        %v788 = vsel %vm774, %v771, %v528
        %v789 = vsel %vm774, %v772, %v530
        %v790 = vsel %vm774, %v773, %v532
        %vm791 = vcmask 195584
        %v792 = vsel %vm791, %v775, %v552
        %v793 = vsel %vm791, %v776, %v554
        %v794 = vsel %vm791, %v777, %v556
        %v795 = vsel %vm791, %v778, %v558
        %v796 = vsel %vm791, %v779, %v560
        %v797 = vsel %vm791, %v780, %v562
        %v798 = vsel %vm791, %v781, %v564
        %v799 = vsel %vm791, %v782, %v566
        %v800 = vsel %vm791, %v783, %v568
        %v801 = vsel %vm791, %v784, %v570
        %v802 = vsel %vm791, %v785, %v572
        %v803 = vsel %vm791, %v786, %v574
        %v804 = vsel %vm791, %v787, %v576
        %v805 = vsel %vm791, %v788, %v578
        %v806 = vsel %vm791, %v789, %v580
        %v807 = vsel %vm791, %v790, %v582
        %vm808 = vcmask 228352
        %v809 = vsel %vm808, %v792, %v606
        %v810 = vsel %vm808, %v793, %v608
        %v811 = vsel %vm808, %v794, %v610
        %v812 = vsel %vm808, %v795, %v612
        %v813 = vsel %vm808, %v796, %v614
        %v814 = vsel %vm808, %v797, %v616
        %v815 = vsel %vm808, %v798, %v618
        %v816 = vsel %vm808, %v799, %v620
        %v817 = vsel %vm808, %v800, %v622
        %v818 = vsel %vm808, %v801, %v624
        %v819 = vsel %vm808, %v802, %v626
        %v820 = vsel %vm808, %v803, %v628
        %v821 = vsel %vm808, %v804, %v630
        %v822 = vsel %vm808, %v805, %v632
        %v823 = vsel %vm808, %v806, %v634
        %v824 = vsel %vm808, %v807, %v636
        %vm825 = vcmask 261120
        %v826 = vsel %vm825, %v809, %v659
        %v827 = vsel %vm825, %v810, %v661
        %v828 = vsel %vm825, %v811, %v663
        %v829 = vsel %vm825, %v812, %v665
        %v830 = vsel %vm825, %v813, %v667
        %v831 = vsel %vm825, %v814, %v669
        %v832 = vsel %vm825, %v815, %v671
        %v833 = vsel %vm825, %v816, %v673
        %v834 = vsel %vm825, %v817, %v675
        %v835 = vsel %vm825, %v818, %v677
        %v836 = vsel %vm825, %v819, %v679
        %v837 = vsel %vm825, %v820, %v681
        %v838 = vsel %vm825, %v821, %v683
        %v839 = vsel %vm825, %v822, %v685
        %v840 = vsel %vm825, %v823, %v687
        %v841 = vsel %vm825, %v824, %v689
        %v842 = vld [vmem:[%s1] sm:$0xff]
        %v843 = vld [vmem:[%s1 + $0x8] sm:$0xff]
        %v844 = vld [vmem:[%s1 + $0x10] sm:$0xff]
        %v845 = vld [vmem:[%s1 + $0x18] sm:$0xff]
        %v846 = vld [vmem:[%s1 + $0x20] sm:$0xf]
        %vm847 = vcmask 293888
        %v849 = vsel %vm847, %v826, 0
        %v852 = vsel %vm847, %v827, 0
        %v855 = vsel %vm847, %v828, 0
        %v858 = vsel %vm847, %v829, 0
        %v861 = vsel %vm847, %v830, 0
        %v864 = vsel %vm847, %v831, 0
        %v867 = vsel %vm847, %v832, 0
        %v870 = vsel %vm847, %v833, 0
        %v873 = vsel %vm847, %v834, 0
        %v876 = vsel %vm847, %v835, 0
        %v879 = vsel %vm847, %v836, 0
        %v882 = vsel %vm847, %v837, 0
        %v885 = vsel %vm847, %v838, 0
        %v888 = vsel %vm847, %v839, 0
        %v891 = vsel %vm847, %v840, 0
        %v894 = vsel %vm847, %v841, 0
        %vm896 = vcmask 1043456
        %v898 = vsel %vm896, %v846, 0
        %900 = vmatprep.subr.mxu0 0.0
        %901 = vmatpush1.msra.mxu0 %v842
        %902 = vmatprep.subr.mxu0 0.0
        %903 = vmatpush1.msra.mxu0 %v843
        %904 = vmatprep.subr.mxu0 0.0
        %905 = vmatpush1.msra.mxu0 %v844
        %906 = vmatprep.subr.mxu0 0.0
        %907 = vmatpush1.msra.mxu0 %v845
        %908 = vmatprep.subr.mxu0 0.0
        %909 = vmatpush1.msra.mxu0 %v898
        %910 = vmatprep.subr.mxu0 0.0
        %911 = vmatpush1.msra.mxu0 0.0
        %912 = vmatprep.subr.mxu0 0.0
        %913 = vmatpush1.msra.mxu0 0.0
        %914 = vmatprep.subr.mxu0 0.0
        %915 = vmatpush1.msra.mxu0 0.0
        %916 = vmatprep.subr.mxu0 0.0
        %917 = vmatpush1.msra.mxu0 0.0
        %918 = vmatprep.subr.mxu0 0.0
        %919 = vmatpush1.msra.mxu0 0.0
        %920 = vmatprep.subr.mxu0 0.0
        %921 = vmatpush1.msra.mxu0 0.0
        %922 = vmatprep.subr.mxu0 0.0
        %923 = vmatpush1.msra.mxu0 0.0
        %924 = vmatprep.subr.mxu0 0.0
        %925 = vmatpush1.msra.mxu0 0.0
        %926 = vmatprep.subr.mxu0 0.0
        %927 = vmatpush1.msra.mxu0 0.0
        %928 = vmatprep.subr.mxu0 0.0
        %929 = vmatpush1.msra.mxu0 0.0
        %930 = vmatprep.subr.mxu0 0.0
        %931 = vmatpush1.msra.mxu0 0.0
        %932 = vmatprep.subr.mxu0 0.0
        %933 = vmatpush1.msra.mxu0 0.0
        %934 = vmatprep.subr.mxu0 0.0
        %935 = vmatpush1.msra.mxu0 0.0
        %936 = vmatprep.subr.mxu0 0.0
        %937 = vmatpush1.msra.mxu0 0.0
        %938 = vmatprep.subr.mxu0 0.0
        %939 = vmatpush1.msra.mxu0 0.0
        %940 = vmatprep.subr.mxu0 0.0
        %941 = vmatpush1.msra.mxu0 0.0
        %942 = vmatprep.subr.mxu0 0.0
        %943 = vmatpush1.msra.mxu0 0.0
        %944 = vmatprep.subr.mxu0 0.0
        %945 = vmatpush1.msra.mxu0 0.0
        %946 = vmatprep.subr.mxu0 0.0
        %947 = vmatpush1.msra.mxu0 0.0
        %948 = vmatprep.subr.mxu0 0.0
        %949 = vmatpush1.msra.mxu0 0.0
        %950 = vmatprep.subr.mxu0 0.0
        %951 = vmatpush1.msra.mxu0 0.0
        %952 = vmatprep.subr.mxu0 0.0
        %953 = vmatpush1.msra.mxu0 0.0
        %954 = vmatprep.subr.mxu0 0.0
        %955 = vmatpush1.msra.mxu0 0.0
        %956 = vmatprep.subr.mxu0 0.0
        %957 = vmatpush1.msra.mxu0 0.0
        %958 = vmatprep.subr.mxu0 0.0
        %959 = vmatpush1.msra.mxu0 0.0
        %960 = vmatprep.subr.mxu0 0.0
        %961 = vmatpush1.msra.mxu0 0.0
        %962 = vmatprep.subr.mxu0 0.0
        %963 = vmatpush1.msra.mxu0 0.0
        %964 = vmatprep.mubr.f32.mxu0 0.0
        %965 = vmatmul.mubr.f32.gmra.mrb[0].mxu0 %v849
        %v966 = vpop.f32.mrb[0].mxu0
        %v967 = vadd.f32 0.0, %v966
        %v968 = vpop.f32.mrb[0].mxu0
        %969 = vmatprep.mubr.f32.mxu0 0.0
        %970 = vmatmul.mubr.f32.gmra.mrb[0].mxu0 %v852
        %v971 = vpop.f32.mrb[0].mxu0
        %v972 = vadd.f32 0.0, %v971
        %v973 = vpop.f32.mrb[0].mxu0
        %974 = vmatprep.mubr.f32.mxu0 0.0
        %975 = vmatmul.mubr.f32.gmra.mrb[0].mxu0 %v855
        %v976 = vpop.f32.mrb[0].mxu0
        %v977 = vadd.f32 0.0, %v976
        %v978 = vpop.f32.mrb[0].mxu0
        %979 = vmatprep.mubr.f32.mxu0 0.0
        %980 = vmatmul.mubr.f32.gmra.mrb[0].mxu0 %v858
        %v981 = vpop.f32.mrb[0].mxu0
        %v982 = vadd.f32 0.0, %v981
        %v983 = vpop.f32.mrb[0].mxu0
        %984 = vmatprep.mubr.f32.mxu0 0.0
        %985 = vmatmul.mubr.f32.gmra.mrb[0].mxu0 %v861
        %v986 = vpop.f32.mrb[0].mxu0
        %v987 = vadd.f32 0.0, %v986
        %v988 = vpop.f32.mrb[0].mxu0
        %989 = vmatprep.mubr.f32.mxu0 0.0
        %990 = vmatmul.mubr.f32.gmra.mrb[0].mxu0 %v864
        %v991 = vpop.f32.mrb[0].mxu0
        %v992 = vadd.f32 0.0, %v991
        %v993 = vpop.f32.mrb[0].mxu0
        %994 = vmatprep.mubr.f32.mxu0 0.0
        %995 = vmatmul.mubr.f32.gmra.mrb[0].mxu0 %v867
        %v996 = vpop.f32.mrb[0].mxu0
        %v997 = vadd.f32 0.0, %v996
        %v998 = vpop.f32.mrb[0].mxu0
        %999 = vmatprep.mubr.f32.mxu0 0.0
        %1000 = vmatmul.mubr.f32.gmra.mrb[0].mxu0 %v870
        %v1001 = vpop.f32.mrb[0].mxu0
        %v1002 = vadd.f32 0.0, %v1001
        %v1003 = vpop.f32.mrb[0].mxu0
        %1004 = vmatprep.mubr.f32.mxu0 0.0
        %1005 = vmatmul.mubr.f32.gmra.mrb[0].mxu0 %v873
        %v1006 = vpop.f32.mrb[0].mxu0
        %v1007 = vadd.f32 0.0, %v1006
        %v1008 = vpop.f32.mrb[0].mxu0
        %1009 = vmatprep.mubr.f32.mxu0 0.0
        %1010 = vmatmul.mubr.f32.gmra.mrb[0].mxu0 %v876
        %v1011 = vpop.f32.mrb[0].mxu0
        %v1012 = vadd.f32 0.0, %v1011
        %v1013 = vpop.f32.mrb[0].mxu0
        %1014 = vmatprep.mubr.f32.mxu0 0.0
        %1015 = vmatmul.mubr.f32.gmra.mrb[0].mxu0 %v879
        %v1016 = vpop.f32.mrb[0].mxu0
        %v1017 = vadd.f32 0.0, %v1016
        %v1018 = vpop.f32.mrb[0].mxu0
        %1019 = vmatprep.mubr.f32.mxu0 0.0
        %1020 = vmatmul.mubr.f32.gmra.mrb[0].mxu0 %v882
        %v1021 = vpop.f32.mrb[0].mxu0
        %v1022 = vadd.f32 0.0, %v1021
        %v1023 = vpop.f32.mrb[0].mxu0
        %1024 = vmatprep.mubr.f32.mxu0 0.0
        %1025 = vmatmul.mubr.f32.gmra.mrb[0].mxu0 %v885
        %v1026 = vpop.f32.mrb[0].mxu0
        %v1027 = vadd.f32 0.0, %v1026
        %v1028 = vpop.f32.mrb[0].mxu0
        %1029 = vmatprep.mubr.f32.mxu0 0.0
        %1030 = vmatmul.mubr.f32.gmra.mrb[0].mxu0 %v888
        %v1031 = vpop.f32.mrb[0].mxu0
        %v1032 = vadd.f32 0.0, %v1031
        %v1033 = vpop.f32.mrb[0].mxu0
        %1034 = vmatprep.mubr.f32.mxu0 0.0
        %1035 = vmatmul.mubr.f32.gmra.mrb[0].mxu0 %v891
        %v1036 = vpop.f32.mrb[0].mxu0
        %v1037 = vadd.f32 0.0, %v1036
        %v1038 = vpop.f32.mrb[0].mxu0
        %1039 = vmatprep.mubr.f32.mxu0 0.0
        %1040 = vmatmul.mubr.f32.gmra.mrb[0].mxu0 %v894
        %v1041 = vpop.f32.mrb[0].mxu0
        %v1042 = vadd.f32 0.0, %v1041
        %v1043 = vpop.f32.mrb[0].mxu0
        %1044 = vdwg.mxu0
        %1045 = vst [vmem:[%s150] sm:$0xff] %v967
        %1046 = vst [vmem:[%s150 + $0x8] sm:$0xff] %v972
        %1047 = vst [vmem:[%s150 + $0x10] sm:$0xff] %v977
        %1048 = vst [vmem:[%s150 + $0x18] sm:$0xff] %v982
        %1049 = vst [vmem:[%s150 + $0x20] sm:$0xff] %v987
        %1050 = vst [vmem:[%s150 + $0x28] sm:$0xff] %v992
        %1051 = vst [vmem:[%s150 + $0x30] sm:$0xff] %v997
        %1052 = vst [vmem:[%s150 + $0x38] sm:$0xff] %v1002
        %1053 = vst [vmem:[%s150 + $0x40] sm:$0xff] %v1007
        %1054 = vst [vmem:[%s150 + $0x48] sm:$0xff] %v1012
        %1055 = vst [vmem:[%s150 + $0x50] sm:$0xff] %v1017
        %1056 = vst [vmem:[%s150 + $0x58] sm:$0xff] %v1022
        %1057 = vst [vmem:[%s150 + $0x60] sm:$0xff] %v1027
        %1058 = vst [vmem:[%s150 + $0x68] sm:$0xff] %v1032
        %1059 = vst [vmem:[%s150 + $0x70] sm:$0xff] %v1037
        %1060 = vst [vmem:[%s150 + $0x78] sm:$0xff] %v1042
        %s1061 = sand.u32 %s85, 1
        %s1062 = scalar_lea.sflag [#allocation3], %s1061
        %s1063 = sand.u32 %s85, 1
        %s1064 = smul.addr %s1063, 128
        %s1065 = scalar_lea.vmem [#allocation2], %s1064
        // Predicated region
        $region29: #{tpu_custom_call.1} parent=27 // pred_check
          %p1066 = pneg %p95
        $region30: #{tpu_custom_call.1} parent=27 // pred_check_branch
          %1068 = sbr.rel (%p1066) target = $region32
        $region31: #{tpu_custom_call.1} parent=27 // pred_region
          %s1069 = smul.u32 8, %s21
          %s1071 = ssub.s32 2048, 2048
          %1072 = vsyncadd %s1062, %s1071
          %s1073 = smul.addr %s1069, 2
          %s1074 = smul.addr %s20, 32
          %s1075 = sadd.s32 %s1073, %s1074
          %s1076 = smul.addr %s1075, 128
          %s1077 = scalar_lea.hbm %s2, %s1076
          %s1078 = sshll.u32 %s1065, 4
          %s1079 = int_to_ptr.vmem [resolvable:$true] %s1078
          %1084 = dma.vmem_to_hbm [thread:$0]  %s1079, 2048, %s1077, %s1062, 128, 128, 8
        $region32: #{tpu_custom_call.1} parent=27 // pred_fallthru
          _
      $region28: #{tpu_custom_call.1} parent=5 // pred_fallthru
        _
      %p1085 = scmp.le.s32.totalorder 2, %s11
      // Predicated region
      $region33: #{tpu_custom_call.1} parent=5 // pred_check
        %p1086 = pneg %p1085
      $region34: #{tpu_custom_call.1} parent=5 // pred_check_branch
        %1088 = sbr.rel (%p1086) target = $region36
      $region35: #{tpu_custom_call.1} parent=5 // pred_region
        %s1089 = ssub.s32 %s11, 2
        // Predicated region
        $region37: #{tpu_custom_call.1} parent=35 // pred_check
          %p1090 = pneg %p101
        $region38: #{tpu_custom_call.1} parent=35 // pred_check_branch
          %1092 = sbr.rel (%p1090) target = $region40
        $region39: #{tpu_custom_call.1} parent=35 // pred_region
          %s1093 = sand.u32 %s86, 1
          %s1094 = scalar_lea.sflag [#allocation3], %s1093
          %s1095 = sand.u32 %s86, 1
          %s1096 = smul.addr %s1095, 128
          %s1097 = scalar_lea.vmem [#allocation2], %s1096
          %1098 = dma.done %s1094, 2048
        $region40: #{tpu_custom_call.1} parent=35 // pred_fallthru
          _
      $region36: #{tpu_custom_call.1} parent=5 // pred_fallthru
        _
    $region6: #{tpu_custom_call.1} parent=1 // loop_footer
      %s15 = sadd.s32 1, %s11
    $region7: #{tpu_custom_call.1} parent=1 // loop_footer_branch
      %10 = sbr.rel target = $region3
    $region8: #{tpu_custom_call.1} parent=1 // loop_exit
      _
    %1099 = vsyncpa [#allocation3], 1
    %s1100 = scalar_lea.sflag [#allocation3], 1
    %1101 = vsyncpa %s1100, 1

</llo_original>
